<compile_context>
chip_gen: v6e
topology: v6e:2x2x1
jax: 0.10.0
libtpu: 0.0.40
codegen_flags: <defaults>
</compile_context>

<pallas_src>
import numpy as np
import jax
import jax.numpy as jnp
from jax.experimental import pallas as pl
from jax.experimental.pallas import tpu as pltpu


def _copy2d_kernel(x_ref, o_ref):
    # Lane-dense 2D identity copy: full unmasked loads/stores, no relayout.
    o_ref[...] = x_ref[...]


def _pick_tile(dim: int, unit: int, max_elems: int) -> int:
    """Largest tile t with dim % t == 0 and either t % unit == 0 or t == dim,
    preferring t <= max_elems.  Falls back to the full dim (always legal per
    the (8,128) BlockSpec rule: full-extent blocks need no alignment)."""
    if dim <= max_elems:
        return dim
    t = (max_elems // unit) * unit
    while t >= unit:
        if dim % t == 0:
            return t
        t -= unit
    return dim


def _identity_copy_2d(x2d):
    """Tiled, pipelined HBM->HBM copy of a 2D (rows, flat) array."""
    B, F = x2d.shape
    itemsize = jnp.dtype(x2d.dtype).itemsize
    # <= ~2 MiB per tile: 2 buffers (double-buffer) x 2 arrays (in+out) = 8 MiB,
    # comfortably under the smallest default scoped-VMEM budget (v5e: 16 MiB).
    budget_elems = (2 * 1024 * 1024) // itemsize
    tf = _pick_tile(F, 128, budget_elems)              # lane-dense flat tile
    tb = _pick_tile(B, 8, max(1, budget_elems // tf))  # multi-row tile
    grid = (B // tb, F // tf)

    return pl.pallas_call(
        _copy2d_kernel,
        out_shape=jax.ShapeDtypeStruct((B, F), x2d.dtype),
        grid_spec=pltpu.PrefetchScalarGridSpec(
            num_scalar_prefetch=0,
            grid=grid,
            in_specs=[pl.BlockSpec((tb, tf), lambda i, j: (i, j))],
            out_specs=pl.BlockSpec((tb, tf), lambda i, j: (i, j)),
        ),
        compiler_params=pltpu.CompilerParams(
            dimension_semantics=("parallel", "parallel"),
        ),
        cost_estimate=pl.CostEstimate(
            flops=0,
            transcendentals=0,
            bytes_accessed=2 * B * F * itemsize,
        ),
    )(x2d)


class FlatteningLayer:
    """JAX/Pallas port of the PyTorch `flattening_layer`."""

    def __init__(self, dims_in):
        # dims_in is a list of per-input shapes (excluding batch), e.g. [(C, H, W)]
        self.size = tuple(int(d) for d in dims_in[0])

    def forward(self, x, rev=False):
        x0 = x[0]
        B = x0.shape[0]
        if not rev:
            flat = int(np.prod(x0.shape[1:]))
            # Wrapper-side reshape: free metadata op, presents a lane-dense 2D
            # slab to the kernel.
            x2d = x0.reshape(B, flat)
            out = _identity_copy_2d(x2d)
            return [out]
        else:
            flat = int(np.prod(self.size))
            x2d = x0.reshape(B, flat)
            out = _identity_copy_2d(x2d)
            return [out.reshape((B,) + self.size)]

    def jacobian(self, x, rev=False):
        # log-det Jacobian of a reshape is 0.
        return 0

    def output_dims(self, input_dims):
        return [(int(np.prod(input_dims[0])),)]


if __name__ == "__main__":
    key = jax.random.PRNGKey(0)
    B, C, H, W = 2, 4, 16, 16
    x = jax.random.normal(key, (B, C, H, W), dtype=jnp.float32)

    layer = FlatteningLayer(dims_in=[(C, H, W)])

    # Forward (flatten)
    y = layer.forward([x], rev=False)[0]
    jax.block_until_ready(y)
    assert y.shape == (B, C * H * W), y.shape
    assert jnp.allclose(y, x.reshape(B, -1)), "flatten mismatch"

    # Reverse (unflatten)
    x_rec = layer.forward([y], rev=True)[0]
    jax.block_until_ready(x_rec)
    assert x_rec.shape == (B, C, H, W), x_rec.shape
    assert jnp.allclose(x_rec, x), "unflatten mismatch"

    print("KERNEL_OK")
</pallas_src>

<mosaic_0001>
module attributes {stable_mosaic.version = 11 : i64} {
  func.func @_copy2d_kernel(%arg0: i32, %arg1: i32, %arg2: memref<2x1024xf32, #tpu.memory_space<vmem>>, %arg3: memref<2x1024xf32, #tpu.memory_space<vmem>>) attributes {dimension_semantics = [#tpu.dimension_semantics<parallel>, #tpu.dimension_semantics<parallel>], iteration_bounds = array<i64: 1, 1>, scalar_prefetch = 0 : i64, scratch_operands = 0 : i64, tpu.core_type = #tpu.core_type<tc>, window_params = [{transform_indices = @transform_0, window_bounds = array<i64: 2, 1024>}, {transform_indices = @transform_1, window_bounds = array<i64: 2, 1024>}]} {
    %c0 = arith.constant 0 : index
    %c0_0 = arith.constant 0 : index
    %0 = vector.load %arg2[%c0, %c0_0] : memref<2x1024xf32, #tpu.memory_space<vmem>>, vector<2x1024xf32>
    %c0_1 = arith.constant 0 : index
    %c0_2 = arith.constant 0 : index
    %1 = vector.load %arg3[%c0_1, %c0_2] : memref<2x1024xf32, #tpu.memory_space<vmem>>, vector<2x1024xf32>
    tpu.vector_store %arg3[%c0_1, %c0_2], %0 {strides = array<i32>} : memref<2x1024xf32, #tpu.memory_space<vmem>>, vector<2x1024xf32>,
    return
  }
  func.func @transform_0(%arg0: i32, %arg1: i32) -> (i32, i32) {
    %c0_i32 = arith.constant 0 : i32
    return %arg0, %arg1 : i32, i32
  }
  func.func @transform_1(%arg0: i32, %arg1: i32) -> (i32, i32) {
    %c0_i32 = arith.constant 0 : i32
    return %arg0, %arg1 : i32, i32
  }
}

</mosaic_0001>

<llo_original>
// kernel: tpu_custom_call.1
$region0: #{tpu_custom_call.1}
  #allocation0 [shape = 'u32[]', space=smem, size = 0x4, offset = 0x4, fixed_abs, tag = 'smem constant byte address 0x4 - core index']
  #allocation1 [shape = 'u32[144,128]{1,0:T(1,128)}', space=vmem, size = 0x12000, scoped, tag = 'internal scratch']
  %s0 = inlined_call_operand.hbm [shape: f32[2,1024], index: 0, kind: input, shape index: {}]
  %s1 = inlined_call_operand.hbm [shape: f32[2,1024], index: 1, kind: output, shape index: {}]
  %s2 = sld [smem:[#allocation0]]
  $region18: #{tpu_custom_call.1} parent=0
    _
  %s4 = ssub.s32 1, %s2
  %s5 = scalar_select 0, %s4, %s2
  $region1: #{tpu_custom_call.1} parent=0
    #allocation2 [shape = 'u8[8192]{0}', space=vmem, size = 0x2000, scoped, tag = 'input window, operand 0, single buffered']
    #allocation3 [shape = 's32[1]{0}', space=sflag, size = 0x4, scoped, tag = 'scoped memory for tpu_custom_call.1']
    #allocation4 [shape = 's32[1]{0}', space=sflag, size = 0x4, scoped, tag = 'scoped memory for tpu_custom_call.1']
    #allocation5 [shape = 'u8[8192]{0}', space=vmem, size = 0x2000, scoped, tag = 'output window, operand 0, single buffered']
    %6 = vsyncpa [#allocation3], 0
    %7 = vsyncpa [#allocation4], 0
    // Predicated region
    $region2: #{tpu_custom_call.1} parent=1 // pred_check
      _
    $region3: #{tpu_custom_call.1} parent=1 // pred_check_branch
      %9 = sbr.rel (0) target = $region5
    $region4: #{tpu_custom_call.1} parent=1 // pred_region
      %s11 = ssub.s32 256, 256
      %12 = vsyncadd [#allocation3], %s11
      %s14 = sshll.u32 [#allocation2], 4
      %s15 = int_to_ptr.vmem [resolvable:$true] %s14
      %17 = dma.hbm_to_vmem [thread:$0]  %s0, 256, %s15, [#allocation3]
    $region5: #{tpu_custom_call.1} parent=1 // pred_fallthru
      _
    // Predicated region
    $region6: #{tpu_custom_call.1} parent=1 // pred_check
      _
    $region7: #{tpu_custom_call.1} parent=1 // pred_check_branch
      %19 = sbr.rel (0) target = $region9
    $region8: #{tpu_custom_call.1} parent=1 // pred_region
      %20 = dma.done [#allocation3], 256
    $region9: #{tpu_custom_call.1} parent=1 // pred_fallthru
      _
    %v21 = vld [vmem:[#allocation2] sm:$0xff]
    %v22 = vld [vmem:[#allocation2 + $0x8] sm:$0xff]
    %23 = vst [vmem:[#allocation5] sm:$0xff] %v21
    %24 = vst [vmem:[#allocation5 + $0x8] sm:$0xff] %v22
    // Predicated region
    $region10: #{tpu_custom_call.1} parent=1 // pred_check
      _
    $region11: #{tpu_custom_call.1} parent=1 // pred_check_branch
      %26 = sbr.rel (0) target = $region13
    $region12: #{tpu_custom_call.1} parent=1 // pred_region
      %s28 = ssub.s32 256, 256
      %29 = vsyncadd [#allocation4], %s28
      %s31 = sshll.u32 [#allocation5], 4
      %s32 = int_to_ptr.vmem [resolvable:$true] %s31
      %34 = dma.vmem_to_hbm [thread:$0]  %s32, 256, %s1, [#allocation4]
    $region13: #{tpu_custom_call.1} parent=1 // pred_fallthru
      _
    // Predicated region
    $region14: #{tpu_custom_call.1} parent=1 // pred_check
      _
    $region15: #{tpu_custom_call.1} parent=1 // pred_check_branch
      %36 = sbr.rel (0) target = $region17
    $region16: #{tpu_custom_call.1} parent=1 // pred_region
      %37 = dma.done [#allocation4], 256
    $region17: #{tpu_custom_call.1} parent=1 // pred_fallthru
      _
    %38 = vsyncpa [#allocation3], 1
    %39 = vsyncpa [#allocation4], 1

</llo_original>
